<compile_context>
chip_gen: v6e
topology: v6e:2x2x1
jax: 0.10.0
libtpu: 0.0.40
codegen_flags: <defaults>
</compile_context>

<pallas_src>
import functools

import jax
import jax.numpy as jnp
from jax.experimental import pallas as pl
from jax.experimental.pallas import tpu as pltpu

# Lane-aligned padded layer widths (true widths: 400, 300, N_input).
H1_PAD = 512    # 400 -> 512
H2_PAD = 384    # 300 -> 384
OUT_PAD = 128   # N_input -> 128 (lane-dense output stores)

# Column chunks for the fused inter-layer epilogues.  256 is a full K pass on
# v6e/v7x (256x256 MXU) and exactly two full passes on v5e (128x128 MXU), so
# chunking adds zero MXU work on any generation while splitting the VPU
# epilogue into overlappable pieces.
H1_CHUNKS = ((0, 256), (256, 256))      # covers H1_PAD = 512
H2_CHUNKS = ((0, 256), (256, 128))      # covers H2_PAD = 384


def _policy_kernel(x_ref, w1_ref, b1_ref, w2_ref, b2_ref, w3_ref, b3_ref, o_ref):
    """Fused 3-layer MLP for one batch tile.

    fc1+ReLU is fused into the fc2 accumulation chunk-by-chunk over h1
    columns (and fc2's ReLU into the fc3 accumulation over h2 columns), so
    the bias/ReLU/bf16-cast epilogue of chunk c overlaps chunk c+1's MXU
    work instead of sitting as an exposed serial VPU phase.
    """
    tb = x_ref.shape[0]
    x = x_ref[...].astype(jnp.bfloat16)

    # fc1 + ReLU  -> accumulate into fc2, chunked over h1 columns.
    acc2 = jnp.zeros((tb, H2_PAD), jnp.float32)
    for start, size in H1_CHUNKS:
        h1_c = jnp.dot(x, w1_ref[:, start:start + size],
                       preferred_element_type=jnp.float32)
        h1_c = jnp.maximum(h1_c + b1_ref[:, start:start + size], 0.0)
        acc2 = acc2 + jnp.dot(h1_c.astype(jnp.bfloat16),
                              w2_ref[start:start + size, :],
                              preferred_element_type=jnp.float32)
    acc2 = acc2 + b2_ref[...]

    # fc2 ReLU -> accumulate into fc3, chunked over h2 columns.
    acc3 = jnp.zeros((tb, OUT_PAD), jnp.float32)
    for start, size in H2_CHUNKS:
        h2_c = jnp.maximum(acc2[:, start:start + size], 0.0)
        acc3 = acc3 + jnp.dot(h2_c.astype(jnp.bfloat16),
                              w3_ref[start:start + size, :],
                              preferred_element_type=jnp.float32)

    # fc3 bias, no activation.
    o_ref[...] = (acc3 + b3_ref[...]).astype(o_ref.dtype)


def _round_up(n, m):
    return ((n + m - 1) // m) * m


def _choose_batch_tile(B, block_b):
    """Pick the batch tile.

    - at least 2 grid steps when there is enough real work to split (so the
      "parallel" axis shards across both v7x TensorCores),
    - otherwise the smallest tile count at block_b, with tb sized to minimize
      dead padded rows (e.g. B=300 -> tb=152, 4 dead rows instead of 212).
    """
    min_tiles = 2 if B >= 16 else 1
    n_tiles = max(-(-B // block_b), min_tiles)
    tb = min(block_b, _round_up(-(-B // n_tiles), 8))
    return max(tb, 8)


@functools.partial(jax.jit, static_argnames=("n_input", "block_b"))
def policy_forward(x, w1, b1, w2, b2, w3, b3, *, n_input, block_b=1024):
    """y = fc3(relu(fc2(relu(fc1(x))))) for x of shape (B, N_state)."""
    B, n_state = x.shape
    out_pad = w3.shape[1]

    tb = _choose_batch_tile(B, block_b)
    b_pad = _round_up(B, tb)
    if b_pad != B:
        x = jnp.pad(x, ((0, b_pad - B), (0, 0)))

    grid = (b_pad // tb,)

    # Weights / biases: constant index_map -> resident in VMEM across steps.
    def const(shape):
        return pl.BlockSpec(shape, lambda i: (0, 0))

    flops = 2 * b_pad * (n_state * H1_PAD + H1_PAD * H2_PAD + H2_PAD * out_pad)
    bytes_accessed = (x.size * 4 + b_pad * out_pad * 4
                      + (w1.size + w2.size + w3.size) * 2
                      + (b1.size + b2.size + b3.size) * 4)

    out = pl.pallas_call(
        _policy_kernel,
        out_shape=jax.ShapeDtypeStruct((b_pad, out_pad), jnp.float32),
        grid=grid,
        in_specs=[
            pl.BlockSpec((tb, n_state), lambda i: (i, 0)),   # x tile (pipelined)
            const(w1.shape), const(b1.shape),
            const(w2.shape), const(b2.shape),
            const(w3.shape), const(b3.shape),
        ],
        out_specs=pl.BlockSpec((tb, out_pad), lambda i: (i, 0)),
        compiler_params=pltpu.CompilerParams(
            dimension_semantics=("parallel",)),
        cost_estimate=pl.CostEstimate(
            flops=flops, transcendentals=0, bytes_accessed=bytes_accessed),
    )(x, w1, b1, w2, b2, w3, b3)

    # Strip batch padding and lane padding of the action dimension.
    return out[:B, :n_input]


def init_policy_params(key, n_state, n_input):
    """nn.Linear-style init (U[-1/sqrt(fan_in), 1/sqrt(fan_in)]), stored
    transposed (in, out), zero-padded to lane-aligned widths.
    Weights bf16, biases f32 (1, out_pad)."""
    dims = [(n_state, 400, n_state, H1_PAD),
            (400, 300, H1_PAD, H2_PAD),
            (300, n_input, H2_PAD, OUT_PAD)]
    params = []
    for fan_in, fan_out, in_pad, out_pad in dims:
        kw, kb, key = jax.random.split(key, 3)
        bound = 1.0 / (fan_in ** 0.5)
        w = jax.random.uniform(kw, (fan_in, fan_out), jnp.float32, -bound, bound)
        b = jax.random.uniform(kb, (1, fan_out), jnp.float32, -bound, bound)
        w_pad = jnp.zeros((in_pad, out_pad), jnp.float32).at[:fan_in, :fan_out].set(w)
        b_pad = jnp.zeros((1, out_pad), jnp.float32).at[:, :fan_out].set(b)
        params += [w_pad.astype(jnp.bfloat16), b_pad]
    return params


def _ref_forward(x, w1, b1, w2, b2, w3, b3, n_input):
    """Pure-JAX reference with the same bf16 matmul inputs / f32 accumulation."""
    h = jnp.dot(x.astype(jnp.bfloat16), w1, preferred_element_type=jnp.float32) + b1
    h = jnp.maximum(h, 0.0)
    h = jnp.dot(h.astype(jnp.bfloat16), w2, preferred_element_type=jnp.float32) + b2
    h = jnp.maximum(h, 0.0)
    h = jnp.dot(h.astype(jnp.bfloat16), w3, preferred_element_type=jnp.float32) + b3
    return h[:, :n_input]


if __name__ == "__main__":
    key = jax.random.PRNGKey(0)
    k_x, k_x2, k_p = jax.random.split(key, 3)

    batch = 2
    n_state = 8    # state dimension (N_state)
    n_input = 4    # action dimension (N_input)

    w1, b1, w2, b2, w3, b3 = init_policy_params(k_p, n_state, n_input)

    # Small-batch case (single grid step, tb rounded to 8).
    x = jax.random.normal(k_x, (batch, n_state), jnp.float32)
    out = policy_forward(x, w1, b1, w2, b2, w3, b3, n_input=n_input)
    jax.block_until_ready(out)

    ref = _ref_forward(x, w1, b1, w2, b2, w3, b3, n_input)
    assert out.shape == (batch, n_input)
    assert jnp.allclose(out, ref, atol=2e-3, rtol=2e-3)

    # Larger batch exercising the multi-step batch grid + padding-aware tb
    # (B=300 -> tb=152, grid=(2,), only 4 padded rows).
    big_b = 300
    x_big = jax.random.normal(k_x2, (big_b, n_state), jnp.float32)
    out_big = policy_forward(x_big, w1, b1, w2, b2, w3, b3, n_input=n_input)
    jax.block_until_ready(out_big)

    ref_big = _ref_forward(x_big, w1, b1, w2, b2, w3, b3, n_input)
    assert out_big.shape == (big_b, n_input)
    assert jnp.allclose(out_big, ref_big, atol=2e-3, rtol=2e-3)

    print("KERNEL_OK")
</pallas_src>

<mosaic_0001>
module attributes {stable_mosaic.version = 11 : i64} {
  func.func @_policy_kernel(%arg0: i32, %arg1: memref<8x8xf32, #tpu.memory_space<vmem>>, %arg2: memref<8x512xbf16, #tpu.memory_space<vmem>>, %arg3: memref<1x512xf32, #tpu.memory_space<vmem>>, %arg4: memref<512x384xbf16, #tpu.memory_space<vmem>>, %arg5: memref<1x384xf32, #tpu.memory_space<vmem>>, %arg6: memref<384x128xbf16, #tpu.memory_space<vmem>>, %arg7: memref<1x128xf32, #tpu.memory_space<vmem>>, %arg8: memref<8x128xf32, #tpu.memory_space<vmem>>) attributes {dimension_semantics = [#tpu.dimension_semantics<parallel>], iteration_bounds = array<i64: 1>, scalar_prefetch = 0 : i64, scratch_operands = 0 : i64, tpu.core_type = #tpu.core_type<tc>, window_params = [{transform_indices = @transform_0, window_bounds = array<i64: 8, 8>}, {pipeline_mode = #tpu.pipeline_mode<synchronous>, transform_indices = @transform_1, window_bounds = array<i64: 8, 512>}, {pipeline_mode = #tpu.pipeline_mode<synchronous>, transform_indices = @transform_2, window_bounds = array<i64: 1, 512>}, {pipeline_mode = #tpu.pipeline_mode<synchronous>, transform_indices = @transform_3, window_bounds = array<i64: 512, 384>}, {pipeline_mode = #tpu.pipeline_mode<synchronous>, transform_indices = @transform_4, window_bounds = array<i64: 1, 384>}, {pipeline_mode = #tpu.pipeline_mode<synchronous>, transform_indices = @transform_5, window_bounds = array<i64: 384, 128>}, {pipeline_mode = #tpu.pipeline_mode<synchronous>, transform_indices = @transform_6, window_bounds = array<i64: 1, 128>}, {transform_indices = @transform_7, window_bounds = array<i64: 8, 128>}]} {
    %c0 = arith.constant 0 : index
    %c0_0 = arith.constant 0 : index
    %0 = vector.load %arg1[%c0, %c0_0] : memref<8x8xf32, #tpu.memory_space<vmem>>, vector<8x8xf32>
    %1 = arith.truncf %0 : vector<8x8xf32> to vector<8x8xbf16>
    %cst = arith.constant 0.000000e+00 : f32
    %2 = vector.broadcast %cst : f32 to vector<8x384xf32>
    %c0_1 = arith.constant 0 : index
    %c0_2 = arith.constant 0 : index
    %3 = vector.load %arg2[%c0_1, %c0_2] : memref<8x512xbf16, #tpu.memory_space<vmem>>, vector<8x256xbf16>
    %cst_3 = arith.constant dense<0.000000e+00> : vector<8x256xf32>
    %4 = tpu.matmul %1, %3, %cst_3 {dimension_numbers = #tpu.dot_dimension_numbers<[1], [0], [0], [1], [0, 0, 1, 1], [], []>} : vector<8x8xbf16>, vector<8x256xbf16>, vector<8x256xf32> -> vector<8x256xf32>
    %c0_4 = arith.constant 0 : index
    %c0_5 = arith.constant 0 : index
    %5 = vector.load %arg3[%c0_4, %c0_5] : memref<1x512xf32, #tpu.memory_space<vmem>>, vector<1x256xf32>
    %6 = vector.broadcast %5 : vector<1x256xf32> to vector<8x256xf32>
    %7 = arith.addf %4, %6 : vector<8x256xf32>
    %cst_6 = arith.constant 0.000000e+00 : f32
    %8 = vector.broadcast %cst_6 : f32 to vector<8x256xf32>
    %9 = arith.maximumf %7, %8 : vector<8x256xf32>
    %10 = arith.truncf %9 : vector<8x256xf32> to vector<8x256xbf16>
    %c0_7 = arith.constant 0 : index
    %c0_8 = arith.constant 0 : index
    %11 = vector.load %arg4[%c0_7, %c0_8] : memref<512x384xbf16, #tpu.memory_space<vmem>>, vector<256x384xbf16>
    %cst_9 = arith.constant dense<0.000000e+00> : vector<8x384xf32>
    %12 = tpu.matmul %10, %11, %cst_9 {dimension_numbers = #tpu.dot_dimension_numbers<[1], [0], [0], [1], [0, 0, 1, 1], [], []>} : vector<8x256xbf16>, vector<256x384xbf16>, vector<8x384xf32> -> vector<8x384xf32>
    %13 = arith.addf %2, %12 : vector<8x384xf32>
    %c0_10 = arith.constant 0 : index
    %c256 = arith.constant 256 : index
    %14 = vector.load %arg2[%c0_10, %c256] : memref<8x512xbf16, #tpu.memory_space<vmem>>, vector<8x256xbf16>
    %cst_11 = arith.constant dense<0.000000e+00> : vector<8x256xf32>
    %15 = tpu.matmul %1, %14, %cst_11 {dimension_numbers = #tpu.dot_dimension_numbers<[1], [0], [0], [1], [0, 0, 1, 1], [], []>} : vector<8x8xbf16>, vector<8x256xbf16>, vector<8x256xf32> -> vector<8x256xf32>
    %c0_12 = arith.constant 0 : index
    %c256_13 = arith.constant 256 : index
    %16 = vector.load %arg3[%c0_12, %c256_13] : memref<1x512xf32, #tpu.memory_space<vmem>>, vector<1x256xf32>
    %17 = vector.broadcast %16 : vector<1x256xf32> to vector<8x256xf32>
    %18 = arith.addf %15, %17 : vector<8x256xf32>
    %cst_14 = arith.constant 0.000000e+00 : f32
    %19 = vector.broadcast %cst_14 : f32 to vector<8x256xf32>
    %20 = arith.maximumf %18, %19 : vector<8x256xf32>
    %21 = arith.truncf %20 : vector<8x256xf32> to vector<8x256xbf16>
    %c256_15 = arith.constant 256 : index
    %c0_16 = arith.constant 0 : index
    %22 = vector.load %arg4[%c256_15, %c0_16] : memref<512x384xbf16, #tpu.memory_space<vmem>>, vector<256x384xbf16>
    %cst_17 = arith.constant dense<0.000000e+00> : vector<8x384xf32>
    %23 = tpu.matmul %21, %22, %cst_17 {dimension_numbers = #tpu.dot_dimension_numbers<[1], [0], [0], [1], [0, 0, 1, 1], [], []>} : vector<8x256xbf16>, vector<256x384xbf16>, vector<8x384xf32> -> vector<8x384xf32>
    %24 = arith.addf %13, %23 : vector<8x384xf32>
    %c0_18 = arith.constant 0 : index
    %c0_19 = arith.constant 0 : index
    %25 = vector.load %arg5[%c0_18, %c0_19] : memref<1x384xf32, #tpu.memory_space<vmem>>, vector<1x384xf32>
    %26 = vector.broadcast %25 : vector<1x384xf32> to vector<8x384xf32>
    %27 = arith.addf %24, %26 : vector<8x384xf32>
    %cst_20 = arith.constant 0.000000e+00 : f32
    %28 = vector.broadcast %cst_20 : f32 to vector<8x128xf32>
    %29 = vector.extract_strided_slice %27 {offsets = [0, 0], sizes = [8, 256], strides = [1, 1]} : vector<8x384xf32> to vector<8x256xf32>
    %cst_21 = arith.constant 0.000000e+00 : f32
    %30 = vector.broadcast %cst_21 : f32 to vector<8x256xf32>
    %31 = arith.maximumf %29, %30 : vector<8x256xf32>
    %32 = arith.truncf %31 : vector<8x256xf32> to vector<8x256xbf16>
    %c0_22 = arith.constant 0 : index
    %c0_23 = arith.constant 0 : index
    %33 = vector.load %arg6[%c0_22, %c0_23] : memref<384x128xbf16, #tpu.memory_space<vmem>>, vector<256x128xbf16>
    %cst_24 = arith.constant dense<0.000000e+00> : vector<8x128xf32>
    %34 = tpu.matmul %32, %33, %cst_24 {dimension_numbers = #tpu.dot_dimension_numbers<[1], [0], [0], [1], [0, 0, 1, 1], [], []>} : vector<8x256xbf16>, vector<256x128xbf16>, vector<8x128xf32> -> vector<8x128xf32>
    %35 = arith.addf %28, %34 : vector<8x128xf32>
    %36 = vector.extract_strided_slice %27 {offsets = [0, 256], sizes = [8, 128], strides = [1, 1]} : vector<8x384xf32> to vector<8x128xf32>
    %cst_25 = arith.constant 0.000000e+00 : f32
    %37 = vector.broadcast %cst_25 : f32 to vector<8x128xf32>
    %38 = arith.maximumf %36, %37 : vector<8x128xf32>
    %39 = arith.truncf %38 : vector<8x128xf32> to vector<8x128xbf16>
    %c256_26 = arith.constant 256 : index
    %c0_27 = arith.constant 0 : index
    %40 = vector.load %arg6[%c256_26, %c0_27] : memref<384x128xbf16, #tpu.memory_space<vmem>>, vector<128x128xbf16>
    %cst_28 = arith.constant dense<0.000000e+00> : vector<8x128xf32>
    %41 = tpu.matmul %39, %40, %cst_28 {dimension_numbers = #tpu.dot_dimension_numbers<[1], [0], [0], [1], [0, 0, 1, 1], [], []>} : vector<8x128xbf16>, vector<128x128xbf16>, vector<8x128xf32> -> vector<8x128xf32>
    %42 = arith.addf %35, %41 : vector<8x128xf32>
    %c0_29 = arith.constant 0 : index
    %c0_30 = arith.constant 0 : index
    %43 = vector.load %arg7[%c0_29, %c0_30] : memref<1x128xf32, #tpu.memory_space<vmem>>, vector<1x128xf32>
    %44 = vector.broadcast %43 : vector<1x128xf32> to vector<8x128xf32>
    %45 = arith.addf %42, %44 : vector<8x128xf32>
    %c0_31 = arith.constant 0 : index
    %c0_32 = arith.constant 0 : index
    %46 = vector.load %arg8[%c0_31, %c0_32] : memref<8x128xf32, #tpu.memory_space<vmem>>, vector<8x128xf32>
    tpu.vector_store %arg8[%c0_31, %c0_32], %45 {strides = array<i32>} : memref<8x128xf32, #tpu.memory_space<vmem>>, vector<8x128xf32>,
    return
  }
  func.func @transform_0(%arg0: i32) -> (i32, i32) {
    %c0_i32 = arith.constant 0 : i32
    %c0_i32_0 = arith.constant 0 : i32
    return %arg0, %c0_i32 : i32, i32
  }
  func.func @transform_1(%arg0: i32) -> (i32, i32) {
    %c0_i32 = arith.constant 0 : i32
    %c0_i32_0 = arith.constant 0 : i32
    %c0_i32_1 = arith.constant 0 : i32
    return %c0_i32, %c0_i32_0 : i32, i32
  }
  func.func @transform_2(%arg0: i32) -> (i32, i32) {
    %c0_i32 = arith.constant 0 : i32
    %c0_i32_0 = arith.constant 0 : i32
    %c0_i32_1 = arith.constant 0 : i32
    return %c0_i32, %c0_i32_0 : i32, i32
  }
  func.func @transform_3(%arg0: i32) -> (i32, i32) {
    %c0_i32 = arith.constant 0 : i32
    %c0_i32_0 = arith.constant 0 : i32
    %c0_i32_1 = arith.constant 0 : i32
    return %c0_i32, %c0_i32_0 : i32, i32
  }
  func.func @transform_4(%arg0: i32) -> (i32, i32) {
    %c0_i32 = arith.constant 0 : i32
    %c0_i32_0 = arith.constant 0 : i32
    %c0_i32_1 = arith.constant 0 : i32
    return %c0_i32, %c0_i32_0 : i32, i32
  }
  func.func @transform_5(%arg0: i32) -> (i32, i32) {
    %c0_i32 = arith.constant 0 : i32
    %c0_i32_0 = arith.constant 0 : i32
    %c0_i32_1 = arith.constant 0 : i32
    return %c0_i32, %c0_i32_0 : i32, i32
  }
  func.func @transform_6(%arg0: i32) -> (i32, i32) {
    %c0_i32 = arith.constant 0 : i32
    %c0_i32_0 = arith.constant 0 : i32
    %c0_i32_1 = arith.constant 0 : i32
    return %c0_i32, %c0_i32_0 : i32, i32
  }
  func.func @transform_7(%arg0: i32) -> (i32, i32) {
    %c0_i32 = arith.constant 0 : i32
    %c0_i32_0 = arith.constant 0 : i32
    return %arg0, %c0_i32 : i32, i32
  }
}

</mosaic_0001>

<llo_original>
// kernel: policy_forward.1
$region0: #{policy_forward.1}
  #allocation0 [shape = 'u32[]', space=smem, size = 0x4, offset = 0x4, fixed_abs, tag = 'smem constant byte address 0x4 - core index']
  #allocation1 [shape = 'u32[144,128]{1,0:T(1,128)}', space=vmem, size = 0x12000, scoped, tag = 'internal scratch']
  %s0 = inlined_call_operand.vmem [shape: f32[8,8], index: 0, kind: input, shape index: {}]
  %s1 = inlined_call_operand.hbm [shape: bf16[8,512], index: 1, kind: input, shape index: {}]
  %s2 = inlined_call_operand.vmem [shape: f32[1,512], index: 2, kind: input, shape index: {}]
  %s3 = inlined_call_operand.hbm [shape: bf16[512,384], index: 3, kind: input, shape index: {}]
  %s4 = inlined_call_operand.vmem [shape: f32[1,384], index: 4, kind: input, shape index: {}]
  %s5 = inlined_call_operand.hbm [shape: bf16[384,128], index: 5, kind: input, shape index: {}]
  %s6 = inlined_call_operand.vmem [shape: f32[1,128], index: 6, kind: input, shape index: {}]
  %s7 = inlined_call_operand.vmem [shape: f32[8,128], index: 7, kind: output, shape index: {}]
  %s8 = sld [smem:[#allocation0]]
  $region50: #{policy_forward.1} parent=0
    _
  %s10 = ssub.s32 1, %s8
  %s11 = scalar_select 0, %s10, %s8
  $region1: #{policy_forward.1} parent=0
    #allocation2 [shape = 'u8[8192]{0}', space=vmem, size = 0x2000, scoped, tag = 'input window, operand 1, single buffered']
    #allocation3 [shape = 's32[1]{0}', space=sflag, size = 0x4, scoped, tag = 'scoped memory for policy_forward.1']
    #allocation4 [shape = 'u8[393216]{0}', space=vmem, size = 0x60000, scoped, tag = 'input window, operand 3, single buffered']
    #allocation5 [shape = 's32[1]{0}', space=sflag, size = 0x4, scoped, tag = 'scoped memory for policy_forward.1']
    #allocation6 [shape = 'u8[98304]{0}', space=vmem, size = 0x18000, scoped, tag = 'input window, operand 5, single buffered']
    %12 = vsyncpa [#allocation3], 0
    %13 = vsyncpa [#allocation5], 0
    // Predicated region
    $region2: #{policy_forward.1} parent=1 // pred_check
      _
    $region3: #{policy_forward.1} parent=1 // pred_check_branch
      %15 = sbr.rel (0) target = $region5
    $region4: #{policy_forward.1} parent=1 // pred_region
      _
    $region5: #{policy_forward.1} parent=1 // pred_fallthru
      _
    // Predicated region
    $region6: #{policy_forward.1} parent=1 // pred_check
      _
    $region7: #{policy_forward.1} parent=1 // pred_check_branch
      %17 = sbr.rel (0) target = $region9
    $region8: #{policy_forward.1} parent=1 // pred_region
      %s19 = ssub.s32 256, 256
      %20 = vsyncadd [#allocation3], %s19
      %s22 = sshll.u32 [#allocation2], 4
      %s23 = int_to_ptr.vmem [resolvable:$true] %s22
      %25 = dma.hbm_to_vmem [thread:$0]  %s1, 256, %s23, [#allocation3]
    $region9: #{policy_forward.1} parent=1 // pred_fallthru
      _
    // Predicated region
    $region10: #{policy_forward.1} parent=1 // pred_check
      _
    $region11: #{policy_forward.1} parent=1 // pred_check_branch
      %27 = sbr.rel (0) target = $region13
    $region12: #{policy_forward.1} parent=1 // pred_region
      _
    $region13: #{policy_forward.1} parent=1 // pred_fallthru
      _
    // Predicated region
    $region14: #{policy_forward.1} parent=1 // pred_check
      _
    $region15: #{policy_forward.1} parent=1 // pred_check_branch
      %29 = sbr.rel (0) target = $region17
    $region16: #{policy_forward.1} parent=1 // pred_region
      %s31 = ssub.s32 12288, 12288
      %32 = vsyncadd [#allocation5], %s31
      %s33 = sshll.u32 [#allocation4], 4
      %s34 = int_to_ptr.vmem [resolvable:$true] %s33
      %39 = dma.hbm_to_vmem [thread:$0]  %s3, 12288, %s34, [#allocation5], 192, 192, 12
    $region17: #{policy_forward.1} parent=1 // pred_fallthru
      _
    // Predicated region
    $region18: #{policy_forward.1} parent=1 // pred_check
      _
    $region19: #{policy_forward.1} parent=1 // pred_check_branch
      %41 = sbr.rel (0) target = $region21
    $region20: #{policy_forward.1} parent=1 // pred_region
      _
    $region21: #{policy_forward.1} parent=1 // pred_fallthru
      _
    // Predicated region
    $region22: #{policy_forward.1} parent=1 // pred_check
      _
    $region23: #{policy_forward.1} parent=1 // pred_check_branch
      %43 = sbr.rel (0) target = $region25
    $region24: #{policy_forward.1} parent=1 // pred_region
      %s45 = ssub.s32 3072, 3072
      %46 = vsyncadd [#allocation5], %s45
      %s47 = sshll.u32 [#allocation6], 4
      %s48 = int_to_ptr.vmem [resolvable:$true] %s47
      %53 = dma.hbm_to_vmem [thread:$0]  %s5, 3072, %s48, [#allocation5], 64, 64, 4
    $region25: #{policy_forward.1} parent=1 // pred_fallthru
      _
    // Predicated region
    $region26: #{policy_forward.1} parent=1 // pred_check
      _
    $region27: #{policy_forward.1} parent=1 // pred_check_branch
      %55 = sbr.rel (0) target = $region29
    $region28: #{policy_forward.1} parent=1 // pred_region
      _
    $region29: #{policy_forward.1} parent=1 // pred_fallthru
      _
    // Predicated region
    $region30: #{policy_forward.1} parent=1 // pred_check
      _
    $region31: #{policy_forward.1} parent=1 // pred_check_branch
      %57 = sbr.rel (0) target = $region33
    $region32: #{policy_forward.1} parent=1 // pred_region
      %58 = dma.done [#allocation3], 256
    $region33: #{policy_forward.1} parent=1 // pred_fallthru
      _
    // Predicated region
    $region34: #{policy_forward.1} parent=1 // pred_check
      _
    $region35: #{policy_forward.1} parent=1 // pred_check_branch
      %60 = sbr.rel (0) target = $region37
    $region36: #{policy_forward.1} parent=1 // pred_region
      %61 = dma.done [#allocation5], 12288
    $region37: #{policy_forward.1} parent=1 // pred_fallthru
      _
    // Predicated region
    $region38: #{policy_forward.1} parent=1 // pred_check
      _
    $region39: #{policy_forward.1} parent=1 // pred_check_branch
      %63 = sbr.rel (0) target = $region41
    $region40: #{policy_forward.1} parent=1 // pred_region
      %64 = dma.done [#allocation5], 3072
    $region41: #{policy_forward.1} parent=1 // pred_fallthru
      _
    %v66 = vld [vmem:[%s0] sm:$0xff]
    %v67 = vpack.c.bf16 %v66, %v66
    %v68 = vld [vmem:[#allocation2] sm:$0xff]
    %v69 = vld [vmem:[%s2] sm:$0x3]
    %v71 = vlaneseq
    %v72 = vshrl.u32 %v71, 7
    %v73 = vsub.s32 0, %v72
    %v74 = vrot.slane %v69, %v73
    %v75 = vlaneseq
    %v76 = vshrl.u32 %v75, 7
    %v77 = vsub.s32 1, %v76
    %v78 = vrot.slane %v69, %v77
    %v82 = vunpack.c.l.b16 %v68
    %v83 = vunpack.c.h.b16 %v68
    %v84 = vpack.c.b16 %v82, %v82
    %v85 = vpack.c.b16 %v83, %v83
    %vm86 = vcmask 64512
    %v88 = vsel %vm86, %v67, 0
    %vm90 = vcmask 1043456
    %v92 = vsel %vm90, %v84, 0
    %v95 = vsel %vm90, %v85, 0
    %97 = vmatprep.subr.bf16.mxu0 0
    %98 = vmatpush1.bf16.msra.mxu0 0
    %99 = vmatprep.subr.bf16.mxu0 0
    %100 = vmatpush1.bf16.msra.mxu0 0
    %101 = vmatprep.subr.bf16.mxu0 0
    %102 = vmatpush1.bf16.msra.mxu0 0
    %103 = vmatprep.subr.bf16.mxu0 0
    %104 = vmatpush1.bf16.msra.mxu0 0
    %105 = vmatprep.subr.bf16.mxu0 0
    %106 = vmatpush1.bf16.msra.mxu0 0
    %107 = vmatprep.subr.bf16.mxu0 0
    %108 = vmatpush1.bf16.msra.mxu0 0
    %109 = vmatprep.subr.bf16.mxu0 0
    %110 = vmatpush1.bf16.msra.mxu0 0
    %111 = vmatprep.subr.bf16.mxu0 %v95
    %112 = vmatpush1.bf16.msra.mxu0 %v92
    %113 = vmatprep.subr.bf16.mxu0 0
    %114 = vmatpush2.bf16.msra.mxu0 0
    %115 = vmatprep.subr.bf16.mxu0 0
    %116 = vmatpush2.bf16.msra.mxu0 0
    %117 = vmatprep.subr.bf16.mxu0 0
    %118 = vmatpush2.bf16.msra.mxu0 0
    %119 = vmatprep.subr.bf16.mxu0 0
    %120 = vmatpush2.bf16.msra.mxu0 0
    %121 = vmatprep.subr.bf16.mxu0 0
    %122 = vmatpush2.bf16.msra.mxu0 0
    %123 = vmatprep.subr.bf16.mxu0 0
    %124 = vmatpush2.bf16.msra.mxu0 0
    %125 = vmatprep.subr.bf16.mxu0 0
    %126 = vmatpush2.bf16.msra.mxu0 0
    %127 = vmatprep.subr.bf16.mxu0 0
    %128 = vmatpush2.bf16.msra.mxu0 0
    %129 = vmatprep.mubr.bf16.mxu0 0
    %130 = vmatmul.mubr.bf16.gmra.mxu0 %v88
    %v131 = vpop.f32.mrf.mxu0
    %v132 = vadd.f32 %v74, %v131
    %v133 = vpop.f32.mrf.mxu0
    %v134 = vadd.f32 %v78, %v133
    %v135 = vpop.f32.mrf.mxu0
    %v136 = vpop.f32.mrf.mxu0
    %137 = vdwg.mxu0
    %v138 = vmax.f32 %v132, 0.0
    %v139 = vmax.f32 %v134, 0.0
    %v140 = vpack.c.bf16 %v138, %v138
    %v141 = vpack.c.bf16 %v139, %v139
    %v142 = vld [vmem:[#allocation4] sm:$0xff]
    %v143 = vld [vmem:[#allocation4 + $0x8] sm:$0xf]
    %v144 = vld [vmem:[#allocation4 + $0xc] sm:$0xff]
    %v145 = vld [vmem:[#allocation4 + $0x14] sm:$0xf]
    %v146 = vld [vmem:[#allocation4 + $0x18] sm:$0xff]
    %v147 = vld [vmem:[#allocation4 + $0x20] sm:$0xf]
    %v148 = vld [vmem:[#allocation4 + $0x24] sm:$0xff]
    %v149 = vld [vmem:[#allocation4 + $0x2c] sm:$0xf]
    %v150 = vld [vmem:[#allocation4 + $0x30] sm:$0xff]
    %v151 = vld [vmem:[#allocation4 + $0x38] sm:$0xf]
    %v152 = vld [vmem:[#allocation4 + $0x3c] sm:$0xff]
    %v153 = vld [vmem:[#allocation4 + $0x44] sm:$0xf]
    %v154 = vld [vmem:[#allocation4 + $0x48] sm:$0xff]
    %v155 = vld [vmem:[#allocation4 + $0x50] sm:$0xf]
    %v156 = vld [vmem:[#allocation4 + $0x54] sm:$0xff]
    %v157 = vld [vmem:[#allocation4 + $0x5c] sm:$0xf]
    %v158 = vld [vmem:[#allocation4 + $0x60] sm:$0xff]
    %v159 = vld [vmem:[#allocation4 + $0x68] sm:$0xf]
    %v160 = vld [vmem:[#allocation4 + $0x6c] sm:$0xff]
    %v161 = vld [vmem:[#allocation4 + $0x74] sm:$0xf]
    %v162 = vld [vmem:[#allocation4 + $0x78] sm:$0xff]
    %v163 = vld [vmem:[#allocation4 + $0x80] sm:$0xf]
    %v164 = vld [vmem:[#allocation4 + $0x84] sm:$0xff]
    %v165 = vld [vmem:[#allocation4 + $0x8c] sm:$0xf]
    %v166 = vld [vmem:[#allocation4 + $0x90] sm:$0xff]
    %v167 = vld [vmem:[#allocation4 + $0x98] sm:$0xf]
    %v168 = vld [vmem:[#allocation4 + $0x9c] sm:$0xff]
    %v169 = vld [vmem:[#allocation4 + $0xa4] sm:$0xf]
    %v170 = vld [vmem:[#allocation4 + $0xa8] sm:$0xff]
    %v171 = vld [vmem:[#allocation4 + $0xb0] sm:$0xf]
    %v172 = vld [vmem:[#allocation4 + $0xb4] sm:$0xff]
    %v173 = vld [vmem:[#allocation4 + $0xbc] sm:$0xf]
    %v174 = vld [vmem:[#allocation4 + $0xc0] sm:$0xff]
    %v175 = vld [vmem:[#allocation4 + $0xc8] sm:$0xf]
    %v176 = vld [vmem:[#allocation4 + $0xcc] sm:$0xff]
    %v177 = vld [vmem:[#allocation4 + $0xd4] sm:$0xf]
    %v178 = vld [vmem:[#allocation4 + $0xd8] sm:$0xff]
    %v179 = vld [vmem:[#allocation4 + $0xe0] sm:$0xf]
    %v180 = vld [vmem:[#allocation4 + $0xe4] sm:$0xff]
    %v181 = vld [vmem:[#allocation4 + $0xec] sm:$0xf]
    %v182 = vld [vmem:[#allocation4 + $0xf0] sm:$0xff]
    %v183 = vld [vmem:[#allocation4 + $0xf8] sm:$0xf]
    %v184 = vld [vmem:[#allocation4 + $0xfc] sm:$0xff]
    %v185 = vld [vmem:[#allocation4 + $0x104] sm:$0xf]
    %v186 = vld [vmem:[#allocation4 + $0x108] sm:$0xff]
    %v187 = vld [vmem:[#allocation4 + $0x110] sm:$0xf]
    %v188 = vld [vmem:[#allocation4 + $0x114] sm:$0xff]
    %v189 = vld [vmem:[#allocation4 + $0x11c] sm:$0xf]
    %v190 = vld [vmem:[#allocation4 + $0x120] sm:$0xff]
    %v191 = vld [vmem:[#allocation4 + $0x128] sm:$0xf]
    %v192 = vld [vmem:[#allocation4 + $0x12c] sm:$0xff]
    %v193 = vld [vmem:[#allocation4 + $0x134] sm:$0xf]
    %v194 = vld [vmem:[#allocation4 + $0x138] sm:$0xff]
    %v195 = vld [vmem:[#allocation4 + $0x140] sm:$0xf]
    %v196 = vld [vmem:[#allocation4 + $0x144] sm:$0xff]
    %v197 = vld [vmem:[#allocation4 + $0x14c] sm:$0xf]
    %v198 = vld [vmem:[#allocation4 + $0x150] sm:$0xff]
    %v199 = vld [vmem:[#allocation4 + $0x158] sm:$0xf]
    %v200 = vld [vmem:[#allocation4 + $0x15c] sm:$0xff]
    %v201 = vld [vmem:[#allocation4 + $0x164] sm:$0xf]
    %v202 = vld [vmem:[#allocation4 + $0x168] sm:$0xff]
    %v203 = vld [vmem:[#allocation4 + $0x170] sm:$0xf]
    %v204 = vld [vmem:[#allocation4 + $0x174] sm:$0xff]
    %v205 = vld [vmem:[#allocation4 + $0x17c] sm:$0xf]
    %v206 = vld [vmem:[#allocation2 + $0x8] sm:$0xff]
    %v207 = vld [vmem:[%s2 + $0x2] sm:$0x3]
    %v209 = vlaneseq
    %v210 = vshrl.u32 %v209, 7
    %v211 = vsub.s32 0, %v210
    %v212 = vrot.slane %v207, %v211
    %v213 = vlaneseq
    %v214 = vshrl.u32 %v213, 7
    %v215 = vsub.s32 1, %v214
    %v216 = vrot.slane %v207, %v215
    %v220 = vunpack.c.l.b16 %v206
    %v221 = vunpack.c.h.b16 %v206
    %v222 = vpack.c.b16 %v220, %v220
    %v223 = vpack.c.b16 %v221, %v221
    %v225 = vsel %vm90, %v222, 0
    %v228 = vsel %vm90, %v223, 0
    %230 = vmatprep.subr.bf16.mxu0 0
    %231 = vmatpush1.bf16.msra.mxu0 0
    %232 = vmatprep.subr.bf16.mxu0 0
    %233 = vmatpush1.bf16.msra.mxu0 0
    %234 = vmatprep.subr.bf16.mxu0 0
    %235 = vmatpush1.bf16.msra.mxu0 0
    %236 = vmatprep.subr.bf16.mxu0 0
    %237 = vmatpush1.bf16.msra.mxu0 0
    %238 = vmatprep.subr.bf16.mxu0 0
    %239 = vmatpush1.bf16.msra.mxu0 0
    %240 = vmatprep.subr.bf16.mxu0 0
    %241 = vmatpush1.bf16.msra.mxu0 0
    %242 = vmatprep.subr.bf16.mxu0 0
    %243 = vmatpush1.bf16.msra.mxu0 0
    %244 = vmatprep.subr.bf16.mxu0 %v228
    %245 = vmatpush1.bf16.msra.mxu0 %v225
    %246 = vmatprep.subr.bf16.mxu0 0
    %247 = vmatpush2.bf16.msra.mxu0 0
    %248 = vmatprep.subr.bf16.mxu0 0
    %249 = vmatpush2.bf16.msra.mxu0 0
    %250 = vmatprep.subr.bf16.mxu0 0
    %251 = vmatpush2.bf16.msra.mxu0 0
    %252 = vmatprep.subr.bf16.mxu0 0
    %253 = vmatpush2.bf16.msra.mxu0 0
    %254 = vmatprep.subr.bf16.mxu0 0
    %255 = vmatpush2.bf16.msra.mxu0 0
    %256 = vmatprep.subr.bf16.mxu0 0
    %257 = vmatpush2.bf16.msra.mxu0 0
    %258 = vmatprep.subr.bf16.mxu0 0
    %259 = vmatpush2.bf16.msra.mxu0 0
    %260 = vmatprep.subr.bf16.mxu0 0
    %261 = vmatpush2.bf16.msra.mxu0 0
    %262 = vmatprep.mubr.bf16.mxu0 0
    %263 = vmatmul.mubr.bf16.gmra.mxu0 %v88
    %v264 = vpop.f32.mrf.mxu0
    %v265 = vadd.f32 %v212, %v264
    %v266 = vpop.f32.mrf.mxu0
    %v267 = vadd.f32 %v216, %v266
    %v268 = vpop.f32.mrf.mxu0
    %v269 = vpop.f32.mrf.mxu0
    %270 = vdwg.mxu0
    %v271 = vmax.f32 %v265, 0.0
    %v272 = vmax.f32 %v267, 0.0
    %v273 = vpack.c.bf16 %v271, %v271
    %v274 = vpack.c.bf16 %v272, %v272
    %v275 = vld [vmem:[#allocation4 + $0x180] sm:$0xff]
    %v276 = vld [vmem:[#allocation4 + $0x188] sm:$0xf]
    %v277 = vld [vmem:[#allocation4 + $0x18c] sm:$0xff]
    %v278 = vld [vmem:[#allocation4 + $0x194] sm:$0xf]
    %v279 = vld [vmem:[#allocation4 + $0x198] sm:$0xff]
    %v280 = vld [vmem:[#allocation4 + $0x1a0] sm:$0xf]
    %v281 = vld [vmem:[#allocation4 + $0x1a4] sm:$0xff]
    %v282 = vld [vmem:[#allocation4 + $0x1ac] sm:$0xf]
    %v283 = vld [vmem:[#allocation4 + $0x1b0] sm:$0xff]
    %v284 = vld [vmem:[#allocation4 + $0x1b8] sm:$0xf]
    %v285 = vld [vmem:[#allocation4 + $0x1bc] sm:$0xff]
    %v286 = vld [vmem:[#allocation4 + $0x1c4] sm:$0xf]
    %v287 = vld [vmem:[#allocation4 + $0x1c8] sm:$0xff]
    %v288 = vld [vmem:[#allocation4 + $0x1d0] sm:$0xf]
    %v289 = vld [vmem:[#allocation4 + $0x1d4] sm:$0xff]
    %v290 = vld [vmem:[#allocation4 + $0x1dc] sm:$0xf]
    %v291 = vld [vmem:[#allocation4 + $0x1e0] sm:$0xff]
    %v292 = vld [vmem:[#allocation4 + $0x1e8] sm:$0xf]
    %v293 = vld [vmem:[#allocation4 + $0x1ec] sm:$0xff]
    %v294 = vld [vmem:[#allocation4 + $0x1f4] sm:$0xf]
    %v295 = vld [vmem:[#allocation4 + $0x1f8] sm:$0xff]
    %v296 = vld [vmem:[#allocation4 + $0x200] sm:$0xf]
    %v297 = vld [vmem:[#allocation4 + $0x204] sm:$0xff]
    %v298 = vld [vmem:[#allocation4 + $0x20c] sm:$0xf]
    %v299 = vld [vmem:[#allocation4 + $0x210] sm:$0xff]
    %v300 = vld [vmem:[#allocation4 + $0x218] sm:$0xf]
    %v301 = vld [vmem:[#allocation4 + $0x21c] sm:$0xff]
    %v302 = vld [vmem:[#allocation4 + $0x224] sm:$0xf]
    %v303 = vld [vmem:[#allocation4 + $0x228] sm:$0xff]
    %v304 = vld [vmem:[#allocation4 + $0x230] sm:$0xf]
    %v305 = vld [vmem:[#allocation4 + $0x234] sm:$0xff]
    %v306 = vld [vmem:[#allocation4 + $0x23c] sm:$0xf]
    %v307 = vld [vmem:[#allocation4 + $0x240] sm:$0xff]
    %v308 = vld [vmem:[#allocation4 + $0x248] sm:$0xf]
    %v309 = vld [vmem:[#allocation4 + $0x24c] sm:$0xff]
    %v310 = vld [vmem:[#allocation4 + $0x254] sm:$0xf]
    %v311 = vld [vmem:[#allocation4 + $0x258] sm:$0xff]
    %v312 = vld [vmem:[#allocation4 + $0x260] sm:$0xf]
    %v313 = vld [vmem:[#allocation4 + $0x264] sm:$0xff]
    %v314 = vld [vmem:[#allocation4 + $0x26c] sm:$0xf]
    %v315 = vld [vmem:[#allocation4 + $0x270] sm:$0xff]
    %v316 = vld [vmem:[#allocation4 + $0x278] sm:$0xf]
    %v317 = vld [vmem:[#allocation4 + $0x27c] sm:$0xff]
    %v318 = vld [vmem:[#allocation4 + $0x284] sm:$0xf]
    %v319 = vld [vmem:[#allocation4 + $0x288] sm:$0xff]
    %v320 = vld [vmem:[#allocation4 + $0x290] sm:$0xf]
    %v321 = vld [vmem:[#allocation4 + $0x294] sm:$0xff]
    %v322 = vld [vmem:[#allocation4 + $0x29c] sm:$0xf]
    %v323 = vld [vmem:[#allocation4 + $0x2a0] sm:$0xff]
    %v324 = vld [vmem:[#allocation4 + $0x2a8] sm:$0xf]
    %v325 = vld [vmem:[#allocation4 + $0x2ac] sm:$0xff]
    %v326 = vld [vmem:[#allocation4 + $0x2b4] sm:$0xf]
    %v327 = vld [vmem:[#allocation4 + $0x2b8] sm:$0xff]
    %v328 = vld [vmem:[#allocation4 + $0x2c0] sm:$0xf]
    %v329 = vld [vmem:[#allocation4 + $0x2c4] sm:$0xff]
    %v330 = vld [vmem:[#allocation4 + $0x2cc] sm:$0xf]
    %v331 = vld [vmem:[#allocation4 + $0x2d0] sm:$0xff]
    %v332 = vld [vmem:[#allocation4 + $0x2d8] sm:$0xf]
    %v333 = vld [vmem:[#allocation4 + $0x2dc] sm:$0xff]
    %v334 = vld [vmem:[#allocation4 + $0x2e4] sm:$0xf]
    %v335 = vld [vmem:[#allocation4 + $0x2e8] sm:$0xff]
    %v336 = vld [vmem:[#allocation4 + $0x2f0] sm:$0xf]
    %v337 = vld [vmem:[#allocation4 + $0x2f4] sm:$0xff]
    %v338 = vld [vmem:[#allocation4 + $0x2fc] sm:$0xf]
    %v403 = vunpack.c.l.b16 %v275
    %v404 = vunpack.c.h.b16 %v275
    %v405 = vunpack.c.l.b16 %v276
    %v406 = vunpack.c.l.b16 %v277
    %v407 = vunpack.c.h.b16 %v277
    %v408 = vunpack.c.l.b16 %v278
    %v409 = vunpack.c.l.b16 %v279
    %v410 = vunpack.c.h.b16 %v279
    %v411 = vunpack.c.l.b16 %v280
    %v412 = vunpack.c.l.b16 %v281
    %v413 = vunpack.c.h.b16 %v281
    %v414 = vunpack.c.l.b16 %v282
    %v415 = vunpack.c.l.b16 %v283
    %v416 = vunpack.c.h.b16 %v283
    %v417 = vunpack.c.l.b16 %v284
    %v418 = vunpack.c.l.b16 %v285
    %v419 = vunpack.c.h.b16 %v285
    %v420 = vunpack.c.l.b16 %v286
    %v421 = vunpack.c.l.b16 %v287
    %v422 = vunpack.c.h.b16 %v287
    %v423 = vunpack.c.l.b16 %v288
    %v424 = vunpack.c.l.b16 %v289
    %v425 = vunpack.c.h.b16 %v289
    %v426 = vunpack.c.l.b16 %v290
    %v427 = vunpack.c.l.b16 %v291
    %v428 = vunpack.c.h.b16 %v291
    %v429 = vunpack.c.l.b16 %v292
    %v430 = vunpack.c.l.b16 %v293
    %v431 = vunpack.c.h.b16 %v293
    %v432 = vunpack.c.l.b16 %v294
    %v433 = vunpack.c.l.b16 %v295
    %v434 = vunpack.c.h.b16 %v295
    %v435 = vunpack.c.l.b16 %v296
    %v436 = vunpack.c.l.b16 %v297
    %v437 = vunpack.c.h.b16 %v297
    %v438 = vunpack.c.l.b16 %v298
    %v439 = vunpack.c.l.b16 %v299
    %v440 = vunpack.c.h.b16 %v299
    %v441 = vunpack.c.l.b16 %v300
    %v442 = vunpack.c.l.b16 %v301
    %v443 = vunpack.c.h.b16 %v301
    %v444 = vunpack.c.l.b16 %v302
    %v445 = vunpack.c.l.b16 %v303
    %v446 = vunpack.c.h.b16 %v303
    %v447 = vunpack.c.l.b16 %v304
    %v448 = vunpack.c.l.b16 %v305
    %v449 = vunpack.c.h.b16 %v305
    %v450 = vunpack.c.l.b16 %v306
    %v451 = vunpack.c.l.b16 %v307
    %v452 = vunpack.c.h.b16 %v307
    %v453 = vunpack.c.l.b16 %v308
    %v454 = vunpack.c.l.b16 %v309
    %v455 = vunpack.c.h.b16 %v309
    %v456 = vunpack.c.l.b16 %v310
    %v457 = vunpack.c.l.b16 %v311
    %v458 = vunpack.c.h.b16 %v311
    %v459 = vunpack.c.l.b16 %v312
    %v460 = vunpack.c.l.b16 %v313
    %v461 = vunpack.c.h.b16 %v313
    %v462 = vunpack.c.l.b16 %v314
    %v463 = vunpack.c.l.b16 %v315
    %v464 = vunpack.c.h.b16 %v315
    %v465 = vunpack.c.l.b16 %v316
    %v466 = vunpack.c.l.b16 %v317
    %v467 = vunpack.c.h.b16 %v317
    %v468 = vunpack.c.l.b16 %v318
    %v469 = vunpack.c.l.b16 %v319
    %v470 = vunpack.c.h.b16 %v319
    %v471 = vunpack.c.l.b16 %v320
    %v472 = vunpack.c.l.b16 %v321
    %v473 = vunpack.c.h.b16 %v321
    %v474 = vunpack.c.l.b16 %v322
    %v475 = vunpack.c.l.b16 %v323
    %v476 = vunpack.c.h.b16 %v323
    %v477 = vunpack.c.l.b16 %v324
    %v478 = vunpack.c.l.b16 %v325
    %v479 = vunpack.c.h.b16 %v325
    %v480 = vunpack.c.l.b16 %v326
    %v481 = vunpack.c.l.b16 %v327
    %v482 = vunpack.c.h.b16 %v327
    %v483 = vunpack.c.l.b16 %v328
    %v484 = vunpack.c.l.b16 %v329
    %v485 = vunpack.c.h.b16 %v329
    %v486 = vunpack.c.l.b16 %v330
    %v487 = vunpack.c.l.b16 %v331
    %v488 = vunpack.c.h.b16 %v331
    %v489 = vunpack.c.l.b16 %v332
    %v490 = vunpack.c.l.b16 %v333
    %v491 = vunpack.c.h.b16 %v333
    %v492 = vunpack.c.l.b16 %v334
    %v493 = vunpack.c.l.b16 %v335
    %v494 = vunpack.c.h.b16 %v335
    %v495 = vunpack.c.l.b16 %v336
    %v496 = vunpack.c.l.b16 %v337
    %v497 = vunpack.c.h.b16 %v337
    %v498 = vunpack.c.l.b16 %v338
    %v499 = vpack.c.b16 %v406, %v403
    %v500 = vpack.c.b16 %v407, %v404
    %v501 = vpack.c.b16 %v408, %v405
    %v502 = vpack.c.b16 %v412, %v409
    %v503 = vpack.c.b16 %v413, %v410
    %v504 = vpack.c.b16 %v414, %v411
    %v505 = vpack.c.b16 %v418, %v415
    %v506 = vpack.c.b16 %v419, %v416
    %v507 = vpack.c.b16 %v420, %v417
    %v508 = vpack.c.b16 %v424, %v421
    %v509 = vpack.c.b16 %v425, %v422
    %v510 = vpack.c.b16 %v426, %v423
    %v511 = vpack.c.b16 %v430, %v427
    %v512 = vpack.c.b16 %v431, %v428
    %v513 = vpack.c.b16 %v432, %v429
    %v514 = vpack.c.b16 %v436, %v433
    %v515 = vpack.c.b16 %v437, %v434
    %v516 = vpack.c.b16 %v438, %v435
    %v517 = vpack.c.b16 %v442, %v439
    %v518 = vpack.c.b16 %v443, %v440
    %v519 = vpack.c.b16 %v444, %v441
    %v520 = vpack.c.b16 %v448, %v445
    %v521 = vpack.c.b16 %v449, %v446
    %v522 = vpack.c.b16 %v450, %v447
    %v523 = vpack.c.b16 %v454, %v451
    %v524 = vpack.c.b16 %v455, %v452
    %v525 = vpack.c.b16 %v456, %v453
    %v526 = vpack.c.b16 %v460, %v457
    %v527 = vpack.c.b16 %v461, %v458
    %v528 = vpack.c.b16 %v462, %v459
    %v529 = vpack.c.b16 %v466, %v463
    %v530 = vpack.c.b16 %v467, %v464
    %v531 = vpack.c.b16 %v468, %v465
    %v532 = vpack.c.b16 %v472, %v469
    %v533 = vpack.c.b16 %v473, %v470
    %v534 = vpack.c.b16 %v474, %v471
    %v535 = vpack.c.b16 %v478, %v475
    %v536 = vpack.c.b16 %v479, %v476
    %v537 = vpack.c.b16 %v480, %v477
    %v538 = vpack.c.b16 %v484, %v481
    %v539 = vpack.c.b16 %v485, %v482
    %v540 = vpack.c.b16 %v486, %v483
    %v541 = vpack.c.b16 %v490, %v487
    %v542 = vpack.c.b16 %v491, %v488
    %v543 = vpack.c.b16 %v492, %v489
    %v544 = vpack.c.b16 %v496, %v493
    %v545 = vpack.c.b16 %v497, %v494
    %v546 = vpack.c.b16 %v498, %v495
    %595 = vmatprep.subr.bf16.mxu0 %v521
    %596 = vmatpush1.bf16.msra.mxu0 %v520
    %597 = vmatprep.subr.bf16.mxu0 %v518
    %598 = vmatpush1.bf16.msra.mxu0 %v517
    %599 = vmatprep.subr.bf16.mxu0 %v515
    %600 = vmatpush1.bf16.msra.mxu0 %v514
    %601 = vmatprep.subr.bf16.mxu0 %v512
    %602 = vmatpush1.bf16.msra.mxu0 %v511
    %603 = vmatprep.subr.bf16.mxu0 %v509
    %604 = vmatpush1.bf16.msra.mxu0 %v508
    %605 = vmatprep.subr.bf16.mxu0 %v506
    %606 = vmatpush1.bf16.msra.mxu0 %v505
    %607 = vmatprep.subr.bf16.mxu0 %v503
    %608 = vmatpush1.bf16.msra.mxu0 %v502
    %609 = vmatprep.subr.bf16.mxu0 %v500
    %610 = vmatpush1.bf16.msra.mxu0 %v499
    %611 = vmatprep.subr.bf16.mxu0 %v545
    %612 = vmatpush2.bf16.msra.mxu0 %v544
    %613 = vmatprep.subr.bf16.mxu0 %v542
    %614 = vmatpush2.bf16.msra.mxu0 %v541
    %615 = vmatprep.subr.bf16.mxu0 %v539
    %616 = vmatpush2.bf16.msra.mxu0 %v538
    %617 = vmatprep.subr.bf16.mxu0 %v536
    %618 = vmatpush2.bf16.msra.mxu0 %v535
    %619 = vmatprep.subr.bf16.mxu0 %v533
    %620 = vmatpush2.bf16.msra.mxu0 %v532
    %621 = vmatprep.subr.bf16.mxu0 %v530
    %622 = vmatpush2.bf16.msra.mxu0 %v529
    %623 = vmatprep.subr.bf16.mxu0 %v527
    %624 = vmatpush2.bf16.msra.mxu0 %v526
    %625 = vmatprep.subr.bf16.mxu0 %v524
    %626 = vmatpush2.bf16.msra.mxu0 %v523
    %627 = vmatprep.mubr.bf16.mxu0 %v274
    %628 = vmatmul.mubr.bf16.gmra.mxu0 %v273
    %v629 = vpop.f32.mrf.mxu0
    %v630 = vadd.f32 0.0, %v629
    %v631 = vpop.f32.mrf.mxu0
    %v632 = vadd.f32 0.0, %v631
    %v633 = vpop.f32.mrf.mxu0
    %v634 = vpop.f32.mrf.mxu0
    %635 = vdwg.mxu0
    %636 = vmatprep.subr.bf16.mxu0 0
    %637 = vmatpush1.bf16.msra.mxu0 %v522
    %638 = vmatprep.subr.bf16.mxu0 0
    %639 = vmatpush1.bf16.msra.mxu0 %v519
    %640 = vmatprep.subr.bf16.mxu0 0
    %641 = vmatpush1.bf16.msra.mxu0 %v516
    %642 = vmatprep.subr.bf16.mxu0 0
    %643 = vmatpush1.bf16.msra.mxu0 %v513
    %644 = vmatprep.subr.bf16.mxu0 0
    %645 = vmatpush1.bf16.msra.mxu0 %v510
    %646 = vmatprep.subr.bf16.mxu0 0
    %647 = vmatpush1.bf16.msra.mxu0 %v507
    %648 = vmatprep.subr.bf16.mxu0 0
    %649 = vmatpush1.bf16.msra.mxu0 %v504
    %650 = vmatprep.subr.bf16.mxu0 0
    %651 = vmatpush1.bf16.msra.mxu0 %v501
    %652 = vmatprep.subr.bf16.mxu0 0
    %653 = vmatpush2.bf16.msra.mxu0 %v546
    %654 = vmatprep.subr.bf16.mxu0 0
    %655 = vmatpush2.bf16.msra.mxu0 %v543
    %656 = vmatprep.subr.bf16.mxu0 0
    %657 = vmatpush2.bf16.msra.mxu0 %v540
    %658 = vmatprep.subr.bf16.mxu0 0
    %659 = vmatpush2.bf16.msra.mxu0 %v537
    %660 = vmatprep.subr.bf16.mxu0 0
    %661 = vmatpush2.bf16.msra.mxu0 %v534
    %662 = vmatprep.subr.bf16.mxu0 0
    %663 = vmatpush2.bf16.msra.mxu0 %v531
    %664 = vmatprep.subr.bf16.mxu0 0
    %665 = vmatpush2.bf16.msra.mxu0 %v528
    %666 = vmatprep.subr.bf16.mxu0 0
    %667 = vmatpush2.bf16.msra.mxu0 %v525
    %668 = vmatprep.mubr.bf16.mxu0 %v274
    %669 = vmatmul.mubr.bf16.gmra.mxu0 %v273
    %v670 = vpop.f32.mrf.mxu0
    %v671 = vadd.f32 0.0, %v670
    %v672 = vpop.f32.mrf.mxu0
    %v673 = vpop.f32.mrf.mxu0
    %v674 = vpop.f32.mrf.mxu0
    %675 = vdwg.mxu0
    %v740 = vunpack.c.l.b16 %v142
    %v741 = vunpack.c.h.b16 %v142
    %v742 = vunpack.c.l.b16 %v143
    %v743 = vunpack.c.l.b16 %v144
    %v744 = vunpack.c.h.b16 %v144
    %v745 = vunpack.c.l.b16 %v145
    %v746 = vunpack.c.l.b16 %v146
    %v747 = vunpack.c.h.b16 %v146
    %v748 = vunpack.c.l.b16 %v147
    %v749 = vunpack.c.l.b16 %v148
    %v750 = vunpack.c.h.b16 %v148
    %v751 = vunpack.c.l.b16 %v149
    %v752 = vunpack.c.l.b16 %v150
    %v753 = vunpack.c.h.b16 %v150
    %v754 = vunpack.c.l.b16 %v151
    %v755 = vunpack.c.l.b16 %v152
    %v756 = vunpack.c.h.b16 %v152
    %v757 = vunpack.c.l.b16 %v153
    %v758 = vunpack.c.l.b16 %v154
    %v759 = vunpack.c.h.b16 %v154
    %v760 = vunpack.c.l.b16 %v155
    %v761 = vunpack.c.l.b16 %v156
    %v762 = vunpack.c.h.b16 %v156
    %v763 = vunpack.c.l.b16 %v157
    %v764 = vunpack.c.l.b16 %v158
    %v765 = vunpack.c.h.b16 %v158
    %v766 = vunpack.c.l.b16 %v159
    %v767 = vunpack.c.l.b16 %v160
    %v768 = vunpack.c.h.b16 %v160
    %v769 = vunpack.c.l.b16 %v161
    %v770 = vunpack.c.l.b16 %v162
    %v771 = vunpack.c.h.b16 %v162
    %v772 = vunpack.c.l.b16 %v163
    %v773 = vunpack.c.l.b16 %v164
    %v774 = vunpack.c.h.b16 %v164
    %v775 = vunpack.c.l.b16 %v165
    %v776 = vunpack.c.l.b16 %v166
    %v777 = vunpack.c.h.b16 %v166
    %v778 = vunpack.c.l.b16 %v167
    %v779 = vunpack.c.l.b16 %v168
    %v780 = vunpack.c.h.b16 %v168
    %v781 = vunpack.c.l.b16 %v169
    %v782 = vunpack.c.l.b16 %v170
    %v783 = vunpack.c.h.b16 %v170
    %v784 = vunpack.c.l.b16 %v171
    %v785 = vunpack.c.l.b16 %v172
    %v786 = vunpack.c.h.b16 %v172
    %v787 = vunpack.c.l.b16 %v173
    %v788 = vunpack.c.l.b16 %v174
    %v789 = vunpack.c.h.b16 %v174
    %v790 = vunpack.c.l.b16 %v175
    %v791 = vunpack.c.l.b16 %v176
    %v792 = vunpack.c.h.b16 %v176
    %v793 = vunpack.c.l.b16 %v177
    %v794 = vunpack.c.l.b16 %v178
    %v795 = vunpack.c.h.b16 %v178
    %v796 = vunpack.c.l.b16 %v179
    %v797 = vunpack.c.l.b16 %v180
    %v798 = vunpack.c.h.b16 %v180
    %v799 = vunpack.c.l.b16 %v181
    %v800 = vunpack.c.l.b16 %v182
    %v801 = vunpack.c.h.b16 %v182
    %v802 = vunpack.c.l.b16 %v183
    %v803 = vunpack.c.l.b16 %v184
    %v804 = vunpack.c.h.b16 %v184
    %v805 = vunpack.c.l.b16 %v185
    %v806 = vunpack.c.l.b16 %v186
    %v807 = vunpack.c.h.b16 %v186
    %v808 = vunpack.c.l.b16 %v187
    %v809 = vunpack.c.l.b16 %v188
    %v810 = vunpack.c.h.b16 %v188
    %v811 = vunpack.c.l.b16 %v189
    %v812 = vunpack.c.l.b16 %v190
    %v813 = vunpack.c.h.b16 %v190
    %v814 = vunpack.c.l.b16 %v191
    %v815 = vunpack.c.l.b16 %v192
    %v816 = vunpack.c.h.b16 %v192
    %v817 = vunpack.c.l.b16 %v193
    %v818 = vunpack.c.l.b16 %v194
    %v819 = vunpack.c.h.b16 %v194
    %v820 = vunpack.c.l.b16 %v195
    %v821 = vunpack.c.l.b16 %v196
    %v822 = vunpack.c.h.b16 %v196
    %v823 = vunpack.c.l.b16 %v197
    %v824 = vunpack.c.l.b16 %v198
    %v825 = vunpack.c.h.b16 %v198
    %v826 = vunpack.c.l.b16 %v199
    %v827 = vunpack.c.l.b16 %v200
    %v828 = vunpack.c.h.b16 %v200
    %v829 = vunpack.c.l.b16 %v201
    %v830 = vunpack.c.l.b16 %v202
    %v831 = vunpack.c.h.b16 %v202
    %v832 = vunpack.c.l.b16 %v203
    %v833 = vunpack.c.l.b16 %v204
    %v834 = vunpack.c.h.b16 %v204
    %v835 = vunpack.c.l.b16 %v205
    %v836 = vpack.c.b16 %v743, %v740
    %v837 = vpack.c.b16 %v744, %v741
    %v838 = vpack.c.b16 %v745, %v742
    %v839 = vpack.c.b16 %v749, %v746
    %v840 = vpack.c.b16 %v750, %v747
    %v841 = vpack.c.b16 %v751, %v748
    %v842 = vpack.c.b16 %v755, %v752
    %v843 = vpack.c.b16 %v756, %v753
    %v844 = vpack.c.b16 %v757, %v754
    %v845 = vpack.c.b16 %v761, %v758
    %v846 = vpack.c.b16 %v762, %v759
    %v847 = vpack.c.b16 %v763, %v760
    %v848 = vpack.c.b16 %v767, %v764
    %v849 = vpack.c.b16 %v768, %v765
    %v850 = vpack.c.b16 %v769, %v766
    %v851 = vpack.c.b16 %v773, %v770
    %v852 = vpack.c.b16 %v774, %v771
    %v853 = vpack.c.b16 %v775, %v772
    %v854 = vpack.c.b16 %v779, %v776
    %v855 = vpack.c.b16 %v780, %v777
    %v856 = vpack.c.b16 %v781, %v778
    %v857 = vpack.c.b16 %v785, %v782
    %v858 = vpack.c.b16 %v786, %v783
    %v859 = vpack.c.b16 %v787, %v784
    %v860 = vpack.c.b16 %v791, %v788
    %v861 = vpack.c.b16 %v792, %v789
    %v862 = vpack.c.b16 %v793, %v790
    %v863 = vpack.c.b16 %v797, %v794
    %v864 = vpack.c.b16 %v798, %v795
    %v865 = vpack.c.b16 %v799, %v796
    %v866 = vpack.c.b16 %v803, %v800
    %v867 = vpack.c.b16 %v804, %v801
    %v868 = vpack.c.b16 %v805, %v802
    %v869 = vpack.c.b16 %v809, %v806
    %v870 = vpack.c.b16 %v810, %v807
    %v871 = vpack.c.b16 %v811, %v808
    %v872 = vpack.c.b16 %v815, %v812
    %v873 = vpack.c.b16 %v816, %v813
    %v874 = vpack.c.b16 %v817, %v814
    %v875 = vpack.c.b16 %v821, %v818
    %v876 = vpack.c.b16 %v822, %v819
    %v877 = vpack.c.b16 %v823, %v820
    %v878 = vpack.c.b16 %v827, %v824
    %v879 = vpack.c.b16 %v828, %v825
    %v880 = vpack.c.b16 %v829, %v826
    %v881 = vpack.c.b16 %v833, %v830
    %v882 = vpack.c.b16 %v834, %v831
    %v883 = vpack.c.b16 %v835, %v832
    %932 = vmatprep.subr.bf16.mxu0 %v858
    %933 = vmatpush1.bf16.msra.mxu0 %v857
    %934 = vmatprep.subr.bf16.mxu0 %v855
    %935 = vmatpush1.bf16.msra.mxu0 %v854
    %936 = vmatprep.subr.bf16.mxu0 %v852
    %937 = vmatpush1.bf16.msra.mxu0 %v851
    %938 = vmatprep.subr.bf16.mxu0 %v849
    %939 = vmatpush1.bf16.msra.mxu0 %v848
    %940 = vmatprep.subr.bf16.mxu0 %v846
    %941 = vmatpush1.bf16.msra.mxu0 %v845
    %942 = vmatprep.subr.bf16.mxu0 %v843
    %943 = vmatpush1.bf16.msra.mxu0 %v842
    %944 = vmatprep.subr.bf16.mxu0 %v840
    %945 = vmatpush1.bf16.msra.mxu0 %v839
    %946 = vmatprep.subr.bf16.mxu0 %v837
    %947 = vmatpush1.bf16.msra.mxu0 %v836
    %948 = vmatprep.subr.bf16.mxu0 %v882
    %949 = vmatpush2.bf16.msra.mxu0 %v881
    %950 = vmatprep.subr.bf16.mxu0 %v879
    %951 = vmatpush2.bf16.msra.mxu0 %v878
    %952 = vmatprep.subr.bf16.mxu0 %v876
    %953 = vmatpush2.bf16.msra.mxu0 %v875
    %954 = vmatprep.subr.bf16.mxu0 %v873
    %955 = vmatpush2.bf16.msra.mxu0 %v872
    %956 = vmatprep.subr.bf16.mxu0 %v870
    %957 = vmatpush2.bf16.msra.mxu0 %v869
    %958 = vmatprep.subr.bf16.mxu0 %v867
    %959 = vmatpush2.bf16.msra.mxu0 %v866
    %960 = vmatprep.subr.bf16.mxu0 %v864
    %961 = vmatpush2.bf16.msra.mxu0 %v863
    %962 = vmatprep.subr.bf16.mxu0 %v861
    %963 = vmatpush2.bf16.msra.mxu0 %v860
    %964 = vmatprep.mubr.bf16.mxu0 %v141
    %965 = vmatmul.mubr.bf16.gmra.mxu0 %v140
    %v966 = vpop.f32.mrf.mxu0
    %v967 = vadd.f32 %v630, %v966
    %v968 = vpop.f32.mrf.mxu0
    %v969 = vadd.f32 %v632, %v968
    %v970 = vpop.f32.mrf.mxu0
    %v971 = vpop.f32.mrf.mxu0
    %972 = vdwg.mxu0
    %973 = vmatprep.subr.bf16.mxu0 0
    %974 = vmatpush1.bf16.msra.mxu0 %v859
    %975 = vmatprep.subr.bf16.mxu0 0
    %976 = vmatpush1.bf16.msra.mxu0 %v856
    %977 = vmatprep.subr.bf16.mxu0 0
    %978 = vmatpush1.bf16.msra.mxu0 %v853
    %979 = vmatprep.subr.bf16.mxu0 0
    %980 = vmatpush1.bf16.msra.mxu0 %v850
    %981 = vmatprep.subr.bf16.mxu0 0
    %982 = vmatpush1.bf16.msra.mxu0 %v847
    %983 = vmatprep.subr.bf16.mxu0 0
    %984 = vmatpush1.bf16.msra.mxu0 %v844
    %985 = vmatprep.subr.bf16.mxu0 0
    %986 = vmatpush1.bf16.msra.mxu0 %v841
    %987 = vmatprep.subr.bf16.mxu0 0
    %988 = vmatpush1.bf16.msra.mxu0 %v838
    %989 = vmatprep.subr.bf16.mxu0 0
    %990 = vmatpush2.bf16.msra.mxu0 %v883
    %991 = vmatprep.subr.bf16.mxu0 0
    %992 = vmatpush2.bf16.msra.mxu0 %v880
    %993 = vmatprep.subr.bf16.mxu0 0
    %994 = vmatpush2.bf16.msra.mxu0 %v877
    %995 = vmatprep.subr.bf16.mxu0 0
    %996 = vmatpush2.bf16.msra.mxu0 %v874
    %997 = vmatprep.subr.bf16.mxu0 0
    %998 = vmatpush2.bf16.msra.mxu0 %v871
    %999 = vmatprep.subr.bf16.mxu0 0
    %1000 = vmatpush2.bf16.msra.mxu0 %v868
    %1001 = vmatprep.subr.bf16.mxu0 0
    %1002 = vmatpush2.bf16.msra.mxu0 %v865
    %1003 = vmatprep.subr.bf16.mxu0 0
    %1004 = vmatpush2.bf16.msra.mxu0 %v862
    %1005 = vmatprep.mubr.bf16.mxu0 %v141
    %1006 = vmatmul.mubr.bf16.gmra.mxu0 %v140
    %v1007 = vpop.f32.mrf.mxu0
    %v1008 = vadd.f32 %v671, %v1007
    %v1009 = vpop.f32.mrf.mxu0
    %v1010 = vpop.f32.mrf.mxu0
    %v1011 = vpop.f32.mrf.mxu0
    %1012 = vdwg.mxu0
    %v1013 = vld [vmem:[%s4] sm:$0x7]
    %v1015 = vlaneseq
    %v1016 = vshrl.u32 %v1015, 7
    %v1017 = vsub.s32 0, %v1016
    %v1018 = vrot.slane %v1013, %v1017
    %v1019 = vlaneseq
    %v1020 = vshrl.u32 %v1019, 7
    %v1021 = vsub.s32 1, %v1020
    %v1022 = vrot.slane %v1013, %v1021
    %v1023 = vlaneseq
    %v1024 = vshrl.u32 %v1023, 7
    %v1025 = vsub.s32 2, %v1024
    %v1026 = vrot.slane %v1013, %v1025
    %v1030 = vadd.f32 %v967, %v1018
    %v1031 = vadd.f32 %v969, %v1022
    %v1032 = vadd.f32 %v1008, %v1026
    %v1033 = vmax.f32 %v1030, 0.0
    %v1034 = vmax.f32 %v1031, 0.0
    %v1035 = vpack.c.bf16 %v1033, %v1033
    %v1036 = vpack.c.bf16 %v1034, %v1034
    %v1037 = vld [vmem:[#allocation6] sm:$0xf]
    %v1038 = vld [vmem:[#allocation6 + $0x4] sm:$0xf]
    %v1039 = vld [vmem:[#allocation6 + $0x8] sm:$0xf]
    %v1040 = vld [vmem:[#allocation6 + $0xc] sm:$0xf]
    %v1041 = vld [vmem:[#allocation6 + $0x10] sm:$0xf]
    %v1042 = vld [vmem:[#allocation6 + $0x14] sm:$0xf]
    %v1043 = vld [vmem:[#allocation6 + $0x18] sm:$0xf]
    %v1044 = vld [vmem:[#allocation6 + $0x1c] sm:$0xf]
    %v1045 = vld [vmem:[#allocation6 + $0x20] sm:$0xf]
    %v1046 = vld [vmem:[#allocation6 + $0x24] sm:$0xf]
    %v1047 = vld [vmem:[#allocation6 + $0x28] sm:$0xf]
    %v1048 = vld [vmem:[#allocation6 + $0x2c] sm:$0xf]
    %v1049 = vld [vmem:[#allocation6 + $0x30] sm:$0xf]
    %v1050 = vld [vmem:[#allocation6 + $0x34] sm:$0xf]
    %v1051 = vld [vmem:[#allocation6 + $0x38] sm:$0xf]
    %v1052 = vld [vmem:[#allocation6 + $0x3c] sm:$0xf]
    %v1053 = vld [vmem:[#allocation6 + $0x40] sm:$0xf]
    %v1054 = vld [vmem:[#allocation6 + $0x44] sm:$0xf]
    %v1055 = vld [vmem:[#allocation6 + $0x48] sm:$0xf]
    %v1056 = vld [vmem:[#allocation6 + $0x4c] sm:$0xf]
    %v1057 = vld [vmem:[#allocation6 + $0x50] sm:$0xf]
    %v1058 = vld [vmem:[#allocation6 + $0x54] sm:$0xf]
    %v1059 = vld [vmem:[#allocation6 + $0x58] sm:$0xf]
    %v1060 = vld [vmem:[#allocation6 + $0x5c] sm:$0xf]
    %v1061 = vld [vmem:[#allocation6 + $0x60] sm:$0xf]
    %v1062 = vld [vmem:[#allocation6 + $0x64] sm:$0xf]
    %v1063 = vld [vmem:[#allocation6 + $0x68] sm:$0xf]
    %v1064 = vld [vmem:[#allocation6 + $0x6c] sm:$0xf]
    %v1065 = vld [vmem:[#allocation6 + $0x70] sm:$0xf]
    %v1066 = vld [vmem:[#allocation6 + $0x74] sm:$0xf]
    %v1067 = vld [vmem:[#allocation6 + $0x78] sm:$0xf]
    %v1068 = vld [vmem:[#allocation6 + $0x7c] sm:$0xf]
    %v1069 = vmax.f32 %v1032, 0.0
    %v1070 = vpack.c.bf16 %v1069, %v1069
    %v1071 = vld [vmem:[#allocation6 + $0x80] sm:$0xf]
    %v1072 = vld [vmem:[#allocation6 + $0x84] sm:$0xf]
    %v1073 = vld [vmem:[#allocation6 + $0x88] sm:$0xf]
    %v1074 = vld [vmem:[#allocation6 + $0x8c] sm:$0xf]
    %v1075 = vld [vmem:[#allocation6 + $0x90] sm:$0xf]
    %v1076 = vld [vmem:[#allocation6 + $0x94] sm:$0xf]
    %v1077 = vld [vmem:[#allocation6 + $0x98] sm:$0xf]
    %v1078 = vld [vmem:[#allocation6 + $0x9c] sm:$0xf]
    %v1079 = vld [vmem:[#allocation6 + $0xa0] sm:$0xf]
    %v1080 = vld [vmem:[#allocation6 + $0xa4] sm:$0xf]
    %v1081 = vld [vmem:[#allocation6 + $0xa8] sm:$0xf]
    %v1082 = vld [vmem:[#allocation6 + $0xac] sm:$0xf]
    %v1083 = vld [vmem:[#allocation6 + $0xb0] sm:$0xf]
    %v1084 = vld [vmem:[#allocation6 + $0xb4] sm:$0xf]
    %v1085 = vld [vmem:[#allocation6 + $0xb8] sm:$0xf]
    %v1086 = vld [vmem:[#allocation6 + $0xbc] sm:$0xf]
    %v1103 = vunpack.c.l.b16 %v1071
    %v1104 = vunpack.c.l.b16 %v1072
    %v1105 = vunpack.c.l.b16 %v1073
    %v1106 = vunpack.c.l.b16 %v1074
    %v1107 = vunpack.c.l.b16 %v1075
    %v1108 = vunpack.c.l.b16 %v1076
    %v1109 = vunpack.c.l.b16 %v1077
    %v1110 = vunpack.c.l.b16 %v1078
    %v1111 = vunpack.c.l.b16 %v1079
    %v1112 = vunpack.c.l.b16 %v1080
    %v1113 = vunpack.c.l.b16 %v1081
    %v1114 = vunpack.c.l.b16 %v1082
    %v1115 = vunpack.c.l.b16 %v1083
    %v1116 = vunpack.c.l.b16 %v1084
    %v1117 = vunpack.c.l.b16 %v1085
    %v1118 = vunpack.c.l.b16 %v1086
    %v1119 = vpack.c.b16 %v1104, %v1103
    %v1120 = vpack.c.b16 %v1106, %v1105
    %v1121 = vpack.c.b16 %v1108, %v1107
    %v1122 = vpack.c.b16 %v1110, %v1109
    %v1123 = vpack.c.b16 %v1112, %v1111
    %v1124 = vpack.c.b16 %v1114, %v1113
    %v1125 = vpack.c.b16 %v1116, %v1115
    %v1126 = vpack.c.b16 %v1118, %v1117
    %1135 = vmatprep.subr.bf16.mxu0 0
    %1136 = vmatpush1.bf16.msra.mxu0 %v1126
    %1137 = vmatprep.subr.bf16.mxu0 0
    %1138 = vmatpush1.bf16.msra.mxu0 %v1125
    %1139 = vmatprep.subr.bf16.mxu0 0
    %1140 = vmatpush1.bf16.msra.mxu0 %v1124
    %1141 = vmatprep.subr.bf16.mxu0 0
    %1142 = vmatpush1.bf16.msra.mxu0 %v1123
    %1143 = vmatprep.subr.bf16.mxu0 0
    %1144 = vmatpush1.bf16.msra.mxu0 %v1122
    %1145 = vmatprep.subr.bf16.mxu0 0
    %1146 = vmatpush1.bf16.msra.mxu0 %v1121
    %1147 = vmatprep.subr.bf16.mxu0 0
    %1148 = vmatpush1.bf16.msra.mxu0 %v1120
    %1149 = vmatprep.subr.bf16.mxu0 0
    %1150 = vmatpush1.bf16.msra.mxu0 %v1119
    %1151 = vmatprep.subr.bf16.mxu0 0
    %1152 = vmatpush2.bf16.msra.mxu0 0
    %1153 = vmatprep.subr.bf16.mxu0 0
    %1154 = vmatpush2.bf16.msra.mxu0 0
    %1155 = vmatprep.subr.bf16.mxu0 0
    %1156 = vmatpush2.bf16.msra.mxu0 0
    %1157 = vmatprep.subr.bf16.mxu0 0
    %1158 = vmatpush2.bf16.msra.mxu0 0
    %1159 = vmatprep.subr.bf16.mxu0 0
    %1160 = vmatpush2.bf16.msra.mxu0 0
    %1161 = vmatprep.subr.bf16.mxu0 0
    %1162 = vmatpush2.bf16.msra.mxu0 0
    %1163 = vmatprep.subr.bf16.mxu0 0
    %1164 = vmatpush2.bf16.msra.mxu0 0
    %1165 = vmatprep.subr.bf16.mxu0 0
    %1166 = vmatpush2.bf16.msra.mxu0 0
    %1167 = vmatprep.mubr.bf16.mxu0 0
    %1168 = vmatmul.mubr.bf16.gmra.mxu0 %v1070
    %v1169 = vpop.f32.mrf.mxu0
    %v1170 = vadd.f32 0.0, %v1169
    %v1171 = vpop.f32.mrf.mxu0
    %v1172 = vpop.f32.mrf.mxu0
    %v1173 = vpop.f32.mrf.mxu0
    %1174 = vdwg.mxu0
    %v1207 = vunpack.c.l.b16 %v1037
    %v1208 = vunpack.c.l.b16 %v1038
    %v1209 = vunpack.c.l.b16 %v1039
    %v1210 = vunpack.c.l.b16 %v1040
    %v1211 = vunpack.c.l.b16 %v1041
    %v1212 = vunpack.c.l.b16 %v1042
    %v1213 = vunpack.c.l.b16 %v1043
    %v1214 = vunpack.c.l.b16 %v1044
    %v1215 = vunpack.c.l.b16 %v1045
    %v1216 = vunpack.c.l.b16 %v1046
    %v1217 = vunpack.c.l.b16 %v1047
    %v1218 = vunpack.c.l.b16 %v1048
    %v1219 = vunpack.c.l.b16 %v1049
    %v1220 = vunpack.c.l.b16 %v1050
    %v1221 = vunpack.c.l.b16 %v1051
    %v1222 = vunpack.c.l.b16 %v1052
    %v1223 = vunpack.c.l.b16 %v1053
    %v1224 = vunpack.c.l.b16 %v1054
    %v1225 = vunpack.c.l.b16 %v1055
    %v1226 = vunpack.c.l.b16 %v1056
    %v1227 = vunpack.c.l.b16 %v1057
    %v1228 = vunpack.c.l.b16 %v1058
    %v1229 = vunpack.c.l.b16 %v1059
    %v1230 = vunpack.c.l.b16 %v1060
    %v1231 = vunpack.c.l.b16 %v1061
    %v1232 = vunpack.c.l.b16 %v1062
    %v1233 = vunpack.c.l.b16 %v1063
    %v1234 = vunpack.c.l.b16 %v1064
    %v1235 = vunpack.c.l.b16 %v1065
    %v1236 = vunpack.c.l.b16 %v1066
    %v1237 = vunpack.c.l.b16 %v1067
    %v1238 = vunpack.c.l.b16 %v1068
    %v1239 = vpack.c.b16 %v1208, %v1207
    %v1240 = vpack.c.b16 %v1210, %v1209
    %v1241 = vpack.c.b16 %v1212, %v1211
    %v1242 = vpack.c.b16 %v1214, %v1213
    %v1243 = vpack.c.b16 %v1216, %v1215
    %v1244 = vpack.c.b16 %v1218, %v1217
    %v1245 = vpack.c.b16 %v1220, %v1219
    %v1246 = vpack.c.b16 %v1222, %v1221
    %v1247 = vpack.c.b16 %v1224, %v1223
    %v1248 = vpack.c.b16 %v1226, %v1225
    %v1249 = vpack.c.b16 %v1228, %v1227
    %v1250 = vpack.c.b16 %v1230, %v1229
    %v1251 = vpack.c.b16 %v1232, %v1231
    %v1252 = vpack.c.b16 %v1234, %v1233
    %v1253 = vpack.c.b16 %v1236, %v1235
    %v1254 = vpack.c.b16 %v1238, %v1237
    %1271 = vmatprep.subr.bf16.mxu0 0
    %1272 = vmatpush1.bf16.msra.mxu0 %v1246
    %1273 = vmatprep.subr.bf16.mxu0 0
    %1274 = vmatpush1.bf16.msra.mxu0 %v1245
    %1275 = vmatprep.subr.bf16.mxu0 0
    %1276 = vmatpush1.bf16.msra.mxu0 %v1244
    %1277 = vmatprep.subr.bf16.mxu0 0
    %1278 = vmatpush1.bf16.msra.mxu0 %v1243
    %1279 = vmatprep.subr.bf16.mxu0 0
    %1280 = vmatpush1.bf16.msra.mxu0 %v1242
    %1281 = vmatprep.subr.bf16.mxu0 0
    %1282 = vmatpush1.bf16.msra.mxu0 %v1241
    %1283 = vmatprep.subr.bf16.mxu0 0
    %1284 = vmatpush1.bf16.msra.mxu0 %v1240
    %1285 = vmatprep.subr.bf16.mxu0 0
    %1286 = vmatpush1.bf16.msra.mxu0 %v1239
    %1287 = vmatprep.subr.bf16.mxu0 0
    %1288 = vmatpush2.bf16.msra.mxu0 %v1254
    %1289 = vmatprep.subr.bf16.mxu0 0
    %1290 = vmatpush2.bf16.msra.mxu0 %v1253
    %1291 = vmatprep.subr.bf16.mxu0 0
    %1292 = vmatpush2.bf16.msra.mxu0 %v1252
    %1293 = vmatprep.subr.bf16.mxu0 0
    %1294 = vmatpush2.bf16.msra.mxu0 %v1251
    %1295 = vmatprep.subr.bf16.mxu0 0
    %1296 = vmatpush2.bf16.msra.mxu0 %v1250
    %1297 = vmatprep.subr.bf16.mxu0 0
    %1298 = vmatpush2.bf16.msra.mxu0 %v1249
    %1299 = vmatprep.subr.bf16.mxu0 0
    %1300 = vmatpush2.bf16.msra.mxu0 %v1248
    %1301 = vmatprep.subr.bf16.mxu0 0
    %1302 = vmatpush2.bf16.msra.mxu0 %v1247
    %1303 = vmatprep.mubr.bf16.mxu0 %v1036
    %1304 = vmatmul.mubr.bf16.gmra.mxu0 %v1035
    %v1305 = vpop.f32.mrf.mxu0
    %v1306 = vadd.f32 %v1170, %v1305
    %v1307 = vpop.f32.mrf.mxu0
    %v1308 = vpop.f32.mrf.mxu0
    %v1309 = vpop.f32.mrf.mxu0
    %1310 = vdwg.mxu0
    %v1311 = vld [vmem:[%s6] sm:$0x1]
    %v1313 = vlaneseq
    %v1314 = vshrl.u32 %v1313, 7
    %v1315 = vsub.s32 0, %v1314
    %v1316 = vrot.slane %v1311, %v1315
    %v1318 = vadd.f32 %v1306, %v1316
    %1319 = vst [vmem:[%s7] sm:$0xff] %v1318
    // Predicated region
    $region42: #{policy_forward.1} parent=1 // pred_check
      _
    $region43: #{policy_forward.1} parent=1 // pred_check_branch
      %1321 = sbr.rel (0) target = $region45
    $region44: #{policy_forward.1} parent=1 // pred_region
      _
    $region45: #{policy_forward.1} parent=1 // pred_fallthru
      _
    // Predicated region
    $region46: #{policy_forward.1} parent=1 // pred_check
      _
    $region47: #{policy_forward.1} parent=1 // pred_check_branch
      %1323 = sbr.rel (0) target = $region49
    $region48: #{policy_forward.1} parent=1 // pred_region
      _
    $region49: #{policy_forward.1} parent=1 // pred_fallthru
      _
    %1324 = vsyncpa [#allocation3], 1
    %1325 = vsyncpa [#allocation5], 1

</llo_original>
